<compile_context>
chip_gen: v6e
topology: v6e:2x2x1
jax: 0.10.0
libtpu: 0.0.40
codegen_flags: <defaults>
</compile_context>

<pallas_src>
import functools

import jax
import jax.numpy as jnp
from jax import lax
from jax.experimental import pallas as pl
from jax.experimental.pallas import tpu as pltpu


def _nonlocal_attention_kernel(x_ref, theta_ref, phi_ref, g_ref, w_w_ref, shift_ref,
                               out_ref):
    """One (batch, query-tile) step: attention + folded W-conv/BatchNorm + residual.

    Per-block shapes (channels-in-sublanes, spatial/queries-in-lanes):
      x_ref     (1, C,  TQ) f32   residual tile
      theta_ref (1, IC, TQ) bf16  theta^T tile, pre-scaled by 1/NS
      phi_ref   (1, NS, IC) bf16  pooled phi  (whole, per batch)
      g_ref     (1, IC, NS) bf16  pooled g^T  (whole, per batch)
      w_w_ref   (C, IC)     f32   W-conv weight^T with BatchNorm scale folded in
      shift_ref (C, 1)      f32   folded W-conv bias + BatchNorm shift
      out_ref   (1, C, TQ)  f32
    """
    # f^T = phi @ (theta/NS)^T : (NS, IC) @ (IC, TQ) -> (NS, TQ); bf16 in / f32 accumulate.
    f_t = jnp.dot(phi_ref[0], theta_ref[0], preferred_element_type=jnp.float32)
    # y^T = g^T @ f^T : (IC, NS) @ (NS, TQ) -> (IC, TQ)
    y_t = jnp.dot(g_ref[0], f_t.astype(jnp.bfloat16),
                  preferred_element_type=jnp.float32)
    # W 1x1 conv with BatchNorm folded in, plus residual (kept in f32, lane-dense store).
    wy_t = jnp.dot(w_w_ref[...], y_t, preferred_element_type=jnp.float32) + shift_ref[...]
    out_ref[0] = wy_t + x_ref[0]


def _const_spec(shape):
    """Loop-invariant block: single-buffer it (index never changes across the grid).

    Falls back silently to the default (double-buffered) spec if the installed JAX
    does not expose pipeline_mode / pl.Buffered.
    """
    index_map = lambda b, q: (0,) * len(shape)
    try:
        return pl.BlockSpec(shape, index_map, pipeline_mode=pl.Buffered(1))
    except (TypeError, AttributeError):
        return pl.BlockSpec(shape, index_map)


def non_local_block(x_nchw, params, *, eps=1e-5, tq=256, vmem_limit_bytes=None):
    """Pallas implementation of _NonLocalBlockND.forward (NCHW in / NCHW out)."""
    B, C, H, W = x_nchw.shape
    assert H % 2 == 0 and W % 2 == 0, "sub_sample=True (MaxPool2d(2)) assumes even H, W"
    IC = params["w_g"].shape[1]
    N = H * W
    NS = (H // 2) * (W // 2)

    TQ = min(tq, N)
    assert N % TQ == 0, "H*W must be divisible by the query tile"
    assert TQ == N or TQ % 128 == 0, "query tile must be lane-aligned (multiple of 128)"
    NQ = N // TQ

    # NCHW -> (B, C, N) is a free reshape (no transpose).
    x_cn = x_nchw.reshape(B, C, N)

    # ---- precompute hoisted out of the hot kernel (cheap O(N*C*IC) XLA ops) -----------
    inv_ns = 1.0 / NS
    theta_t = ((jnp.einsum("ci,bcn->bin", params["w_theta"], x_cn)
                + params["b_theta"].reshape(1, IC, 1)) * inv_ns)        # (B, IC, N)
    theta_t = theta_t.astype(jnp.bfloat16)

    def conv_pool(w, b):
        z = jnp.einsum("ci,bcn->bin", w, x_cn) + b.reshape(1, IC, 1)    # (B, IC, N)
        z = z.reshape(B, IC, H // 2, 2, W // 2, 2).max(axis=(3, 5))     # 2x2 max-pool
        return z.reshape(B, IC, NS)

    g_t = conv_pool(params["w_g"], params["b_g"]).astype(jnp.bfloat16)           # (B, IC, NS)
    phi = jnp.transpose(conv_pool(params["w_phi"], params["b_phi"]),
                        (0, 2, 1)).astype(jnp.bfloat16)                          # (B, NS, IC)

    # ---- fold BatchNorm (inference form) into the W 1x1 conv --------------------------
    bn_scale = params["bn_gamma"] * lax.rsqrt(params["bn_var"] + eps)            # (1, C)
    w_w_t = jnp.transpose(params["w_w"] * bn_scale)                              # (C, IC)
    shift = ((params["b_w"] - params["bn_mean"]) * bn_scale
             + params["bn_beta"]).reshape(C, 1)                                  # (C, 1)

    # ---- VMEM budget: only override the compiler default when big shapes need it ------
    if vmem_limit_bytes is None:
        step_bytes = (2 * (C * TQ * 4 + IC * TQ * 2 + C * TQ * 4)   # x / theta / out (dbl-buffered)
                      + 2 * (NS * IC * 2 + IC * NS * 2)             # phi / g per-batch blocks
                      + (C * IC + C) * 4                            # folded W weights
                      + (NS * TQ + IC * TQ + C * TQ) * 4)           # f / y / wy intermediates
        needed = int(step_bytes * 1.5) + (1 << 20)
        if needed > (16 << 20):
            vmem_limit_bytes = min(needed, 60 << 20)   # stay below v7x's 64 MiB physical

    out_cn = pl.pallas_call(
        _nonlocal_attention_kernel,
        grid=(B, NQ),
        in_specs=[
            pl.BlockSpec((1, C, TQ), lambda b, q: (b, 0, q)),      # x residual tile
            pl.BlockSpec((1, IC, TQ), lambda b, q: (b, 0, q)),     # theta^T tile (1/NS folded)
            pl.BlockSpec((1, NS, IC), lambda b, q: (b, 0, 0)),     # pooled phi   (per batch)
            pl.BlockSpec((1, IC, NS), lambda b, q: (b, 0, 0)),     # pooled g^T   (per batch)
            _const_spec((C, IC)),                                  # folded W-conv weight^T
            _const_spec((C, 1)),                                   # folded BN/bias shift
        ],
        out_specs=pl.BlockSpec((1, C, TQ), lambda b, q: (b, 0, q)),
        # TODO(synk): emit bf16 output if the consumer tolerates it (halves HBM writeback);
        # kept f32 so the BatchNorm-init residual identity stays exact.
        out_shape=jax.ShapeDtypeStruct((B, C, N), jnp.float32),
        compiler_params=pltpu.CompilerParams(
            dimension_semantics=("parallel", "parallel"),
            vmem_limit_bytes=vmem_limit_bytes,
        ),
    )(x_cn, theta_t, phi, g_t, w_w_t, shift)

    # (B, C, N) -> NCHW is a free reshape.
    return out_cn.reshape(B, C, H, W)


def reference(x_nchw, params, *, eps=1e-5):
    """Pure-JAX (f32) reference of the same forward pass, for verification."""
    B, C, H, W = x_nchw.shape
    IC = params["w_g"].shape[1]
    x = jnp.transpose(x_nchw, (0, 2, 3, 1))  # (B, H, W, C)

    def conv1x1(z, w, b):
        return jnp.einsum("bhwc,cd->bhwd", z, w) + b[0]

    def pool2x2(z):
        b_, h_, w_, d_ = z.shape
        return jnp.max(z.reshape(b_, h_ // 2, 2, w_ // 2, 2, d_), axis=(2, 4))

    g = pool2x2(conv1x1(x, params["w_g"], params["b_g"])).reshape(B, -1, IC)
    phi = pool2x2(conv1x1(x, params["w_phi"], params["b_phi"])).reshape(B, -1, IC)
    theta = conv1x1(x, params["w_theta"], params["b_theta"]).reshape(B, -1, IC)

    f = jnp.einsum("bnk,bmk->bnm", theta, phi) / g.shape[1]
    y = jnp.einsum("bnm,bmk->bnk", f, g)

    wy = jnp.einsum("bnk,kc->bnc", y, params["w_w"]) + params["b_w"][0]
    wy = (wy - params["bn_mean"][0]) * lax.rsqrt(params["bn_var"][0] + eps) \
         * params["bn_gamma"][0] + params["bn_beta"][0]
    out = wy + x.reshape(B, H * W, C)
    return jnp.transpose(out.reshape(B, H, W, C), (0, 3, 1, 2))


if __name__ == "__main__":
    B, C, H, W = 2, 8, 16, 16
    IC = max(C // 2, 1)

    key = jax.random.PRNGKey(0)
    ks = jax.random.split(key, 13)
    x = jax.random.normal(ks[0], (B, C, H, W), jnp.float32)

    base = {
        "w_g":     0.2 * jax.random.normal(ks[1], (C, IC), jnp.float32),
        "b_g":     0.1 * jax.random.normal(ks[2], (1, IC), jnp.float32),
        "w_theta": 0.2 * jax.random.normal(ks[3], (C, IC), jnp.float32),
        "b_theta": 0.1 * jax.random.normal(ks[4], (1, IC), jnp.float32),
        "w_phi":   0.2 * jax.random.normal(ks[5], (C, IC), jnp.float32),
        "b_phi":   0.1 * jax.random.normal(ks[6], (1, IC), jnp.float32),
        "w_w":     0.2 * jax.random.normal(ks[7], (IC, C), jnp.float32),
        "b_w":     0.1 * jax.random.normal(ks[8], (1, C), jnp.float32),
    }

    # (1) Non-trivial BatchNorm parameters (as after training) -- exercises the full path.
    params = dict(base)
    params.update({
        "bn_gamma": 1.0 + 0.1 * jax.random.normal(ks[9], (1, C), jnp.float32),
        "bn_beta":  0.1 * jax.random.normal(ks[10], (1, C), jnp.float32),
        "bn_mean":  0.1 * jax.random.normal(ks[11], (1, C), jnp.float32),
        "bn_var":   1.0 + 0.5 * jnp.abs(jax.random.normal(ks[12], (1, C), jnp.float32)),
    })
    out = non_local_block(x, params)
    jax.block_until_ready(out)
    out_expected = reference(x, params)
    err = float(jnp.max(jnp.abs(out - out_expected)))
    assert jnp.allclose(out, out_expected, atol=3e-2, rtol=3e-2), \
        f"output mismatch, max err {err:.3e}"

    # (2) Module-init BatchNorm (weight = bias = 0): forward must reduce to identity.
    params_init = dict(base)
    params_init.update({
        "bn_gamma": jnp.zeros((1, C), jnp.float32),
        "bn_beta":  jnp.zeros((1, C), jnp.float32),
        "bn_mean":  jnp.zeros((1, C), jnp.float32),
        "bn_var":   jnp.ones((1, C), jnp.float32),
    })
    out0 = non_local_block(x, params_init)
    jax.block_until_ready(out0)
    assert jnp.allclose(out0, x, atol=1e-5, rtol=1e-5), "residual identity mismatch"

    print("KERNEL_OK")
</pallas_src>

<mosaic_0001>
module attributes {stable_mosaic.version = 11 : i64} {
  func.func @_nonlocal_attention_kernel(%arg0: i32, %arg1: i32, %arg2: memref<1x8x256xf32, #tpu.memory_space<vmem>>, %arg3: memref<1x4x256xbf16, #tpu.memory_space<vmem>>, %arg4: memref<1x64x4xbf16, #tpu.memory_space<vmem>>, %arg5: memref<1x4x64xbf16, #tpu.memory_space<vmem>>, %arg6: memref<8x4xf32, #tpu.memory_space<vmem>>, %arg7: memref<8x1xf32, #tpu.memory_space<vmem>>, %arg8: memref<1x8x256xf32, #tpu.memory_space<vmem>>) attributes {dimension_semantics = [#tpu.dimension_semantics<parallel>, #tpu.dimension_semantics<parallel>], iteration_bounds = array<i64: 2, 1>, scalar_prefetch = 0 : i64, scratch_operands = 0 : i64, tpu.core_type = #tpu.core_type<tc>, window_params = [{transform_indices = @transform_0, window_bounds = array<i64: 1, 8, 256>}, {transform_indices = @transform_1, window_bounds = array<i64: 1, 4, 256>}, {transform_indices = @transform_2, window_bounds = array<i64: 1, 64, 4>}, {transform_indices = @transform_3, window_bounds = array<i64: 1, 4, 64>}, {pipeline_mode = #tpu.pipeline_mode<synchronous>, transform_indices = @transform_4, window_bounds = array<i64: 8, 4>}, {pipeline_mode = #tpu.pipeline_mode<synchronous>, transform_indices = @transform_5, window_bounds = array<i64: 8, 1>}, {transform_indices = @transform_6, window_bounds = array<i64: 1, 8, 256>}]} {
    %c0 = arith.constant 0 : index
    %c0_0 = arith.constant 0 : index
    %c0_1 = arith.constant 0 : index
    %0 = vector.load %arg4[%c0, %c0_0, %c0_1] : memref<1x64x4xbf16, #tpu.memory_space<vmem>>, vector<1x64x4xbf16>
    %1 = vector.shape_cast %0 : vector<1x64x4xbf16> to vector<64x4xbf16>
    %c0_2 = arith.constant 0 : index
    %c0_3 = arith.constant 0 : index
    %c0_4 = arith.constant 0 : index
    %2 = vector.load %arg3[%c0_2, %c0_3, %c0_4] : memref<1x4x256xbf16, #tpu.memory_space<vmem>>, vector<1x4x256xbf16>
    %3 = vector.shape_cast %2 : vector<1x4x256xbf16> to vector<4x256xbf16>
    %cst = arith.constant dense<0.000000e+00> : vector<64x256xf32>
    %4 = tpu.matmul %1, %3, %cst {dimension_numbers = #tpu.dot_dimension_numbers<[1], [0], [0], [1], [0, 0, 1, 1], [], []>} : vector<64x4xbf16>, vector<4x256xbf16>, vector<64x256xf32> -> vector<64x256xf32>
    %c0_5 = arith.constant 0 : index
    %c0_6 = arith.constant 0 : index
    %c0_7 = arith.constant 0 : index
    %5 = vector.load %arg5[%c0_5, %c0_6, %c0_7] : memref<1x4x64xbf16, #tpu.memory_space<vmem>>, vector<1x4x64xbf16>
    %6 = vector.shape_cast %5 : vector<1x4x64xbf16> to vector<4x64xbf16>
    %7 = arith.truncf %4 : vector<64x256xf32> to vector<64x256xbf16>
    %cst_8 = arith.constant dense<0.000000e+00> : vector<4x256xf32>
    %8 = tpu.matmul %6, %7, %cst_8 {dimension_numbers = #tpu.dot_dimension_numbers<[1], [0], [0], [1], [0, 0, 1, 1], [], []>} : vector<4x64xbf16>, vector<64x256xbf16>, vector<4x256xf32> -> vector<4x256xf32>
    %c0_9 = arith.constant 0 : index
    %c0_10 = arith.constant 0 : index
    %9 = vector.load %arg6[%c0_9, %c0_10] : memref<8x4xf32, #tpu.memory_space<vmem>>, vector<8x4xf32>
    %cst_11 = arith.constant dense<0.000000e+00> : vector<8x256xf32>
    %10 = tpu.matmul %9, %8, %cst_11 {dimension_numbers = #tpu.dot_dimension_numbers<[1], [0], [0], [1], [0, 0, 1, 1], [], []>} : vector<8x4xf32>, vector<4x256xf32>, vector<8x256xf32> -> vector<8x256xf32>
    %c0_12 = arith.constant 0 : index
    %c0_13 = arith.constant 0 : index
    %11 = vector.load %arg7[%c0_12, %c0_13] : memref<8x1xf32, #tpu.memory_space<vmem>>, vector<8x1xf32>
    %12 = vector.broadcast %11 : vector<8x1xf32> to vector<8x256xf32>
    %13 = arith.addf %10, %12 : vector<8x256xf32>
    %c0_14 = arith.constant 0 : index
    %c0_15 = arith.constant 0 : index
    %c0_16 = arith.constant 0 : index
    %14 = vector.load %arg2[%c0_14, %c0_15, %c0_16] : memref<1x8x256xf32, #tpu.memory_space<vmem>>, vector<1x8x256xf32>
    %15 = vector.shape_cast %14 : vector<1x8x256xf32> to vector<8x256xf32>
    %16 = arith.addf %13, %15 : vector<8x256xf32>
    %c0_17 = arith.constant 0 : index
    %c0_18 = arith.constant 0 : index
    %c0_19 = arith.constant 0 : index
    %17 = vector.load %arg8[%c0_17, %c0_18, %c0_19] : memref<1x8x256xf32, #tpu.memory_space<vmem>>, vector<1x8x256xf32>
    %18 = vector.shape_cast %17 : vector<1x8x256xf32> to vector<8x256xf32>
    %19 = vector.shape_cast %16 : vector<8x256xf32> to vector<1x8x256xf32>
    tpu.vector_store %arg8[%c0_17, %c0_18, %c0_19], %19 {strides = array<i32>} : memref<1x8x256xf32, #tpu.memory_space<vmem>>, vector<1x8x256xf32>,
    return
  }
  func.func @transform_0(%arg0: i32, %arg1: i32) -> (i32, i32, i32) {
    %c0_i32 = arith.constant 0 : i32
    %c0_i32_0 = arith.constant 0 : i32
    return %arg0, %c0_i32, %arg1 : i32, i32, i32
  }
  func.func @transform_1(%arg0: i32, %arg1: i32) -> (i32, i32, i32) {
    %c0_i32 = arith.constant 0 : i32
    %c0_i32_0 = arith.constant 0 : i32
    return %arg0, %c0_i32, %arg1 : i32, i32, i32
  }
  func.func @transform_2(%arg0: i32, %arg1: i32) -> (i32, i32, i32) {
    %c0_i32 = arith.constant 0 : i32
    %c0_i32_0 = arith.constant 0 : i32
    %c0_i32_1 = arith.constant 0 : i32
    return %arg0, %c0_i32, %c0_i32_0 : i32, i32, i32
  }
  func.func @transform_3(%arg0: i32, %arg1: i32) -> (i32, i32, i32) {
    %c0_i32 = arith.constant 0 : i32
    %c0_i32_0 = arith.constant 0 : i32
    %c0_i32_1 = arith.constant 0 : i32
    return %arg0, %c0_i32, %c0_i32_0 : i32, i32, i32
  }
  func.func @transform_4(%arg0: i32, %arg1: i32) -> (i32, i32) {
    %c0_i32 = arith.constant 0 : i32
    %c0_i32_0 = arith.constant 0 : i32
    %c0_i32_1 = arith.constant 0 : i32
    return %c0_i32, %c0_i32_0 : i32, i32
  }
  func.func @transform_5(%arg0: i32, %arg1: i32) -> (i32, i32) {
    %c0_i32 = arith.constant 0 : i32
    %c0_i32_0 = arith.constant 0 : i32
    %c0_i32_1 = arith.constant 0 : i32
    return %c0_i32, %c0_i32_0 : i32, i32
  }
  func.func @transform_6(%arg0: i32, %arg1: i32) -> (i32, i32, i32) {
    %c0_i32 = arith.constant 0 : i32
    %c0_i32_0 = arith.constant 0 : i32
    return %arg0, %c0_i32, %arg1 : i32, i32, i32
  }
}

</mosaic_0001>

<llo_original>
// kernel: tpu_custom_call.1
$region0: #{tpu_custom_call.1}
  #allocation0 [shape = 'u32[]', space=smem, size = 0x4, offset = 0x4, fixed_abs, tag = 'smem constant byte address 0x4 - core index']
  #allocation1 [shape = 'u32[144,128]{1,0:T(1,128)}', space=vmem, size = 0x12000, scoped, tag = 'internal scratch']
  %s0 = inlined_call_operand.vmem [shape: f32[2,8,256], index: 0, kind: input, shape index: {}]
  %s1 = inlined_call_operand.vmem [shape: bf16[2,4,256], index: 1, kind: input, shape index: {}]
  %s2 = inlined_call_operand.vmem [shape: bf16[2,64,4], index: 2, kind: input, shape index: {}]
  %s3 = inlined_call_operand.vmem [shape: bf16[2,4,64], index: 3, kind: input, shape index: {}]
  %s4 = inlined_call_operand.vmem [shape: f32[8,4], index: 4, kind: input, shape index: {}]
  %s5 = inlined_call_operand.vmem [shape: f32[8,1], index: 5, kind: input, shape index: {}]
  %s6 = inlined_call_operand.hbm [shape: f32[2,8,256], index: 6, kind: output, shape index: {}]
  %s7 = sld [smem:[#allocation0]]
  $region57: #{tpu_custom_call.1} parent=0
    _
  %s9 = ssub.s32 1, %s7
  %s10 = scalar_select 0, %s9, %s7
  $region1: #{tpu_custom_call.1} parent=0
    #allocation2 [shape = 'u8[16384]{0}', space=vmem, size = 0x4000, scoped, tag = 'output window, operand 0']
    #allocation3 [shape = 's32[2]{0}', space=sflag, size = 0x8, scoped, tag = 'scoped memory for tpu_custom_call.1']
    %11 = vsyncpa [#allocation3], 0
    %s12 = scalar_lea.sflag [#allocation3], 1
    %13 = vsyncpa %s12, 0
    loop: start=0, step=1, limit=4
    $region2: #{tpu_custom_call.1} parent=1 // loop_pre_header
      _
    $region3: #{tpu_custom_call.1} parent=1 // loop_header
      %s15 = sphi 0, %s19
      %p16 = scmp.ge.s32.totalorder %s15, 4
      %s22 = sphi 0, %s34
      %s23 = sphi 0, %s30
      %s24 = sphi 0, %s22
      %s25 = sphi 0, %s23
      %s26 = sphi 0, %s24
      %s27 = sphi 0, %s25
      %s39 = sphi 0, %s41
      %s42 = sphi 0, %s39
      %s43 = sphi 0, %s42
      %s59 = sphi 0, %s43
      %s67 = sphi 0, %s69
      %s70 = sphi 0, %s67
      %s71 = sphi 0, %s70
      %s87 = sphi 0, %s71
      %s93 = sphi 0, %s95
      %s96 = sphi 0, %s93
      %s97 = sphi 0, %s96
      %s113 = sphi 0, %s97
      %s119 = sphi 0, %s121
      %s122 = sphi 0, %s119
      %s123 = sphi 0, %s122
      %s139 = sphi 0, %s123
      %s143 = sphi 0, %s143
      %s145 = sphi 0, %s143
      %s146 = sphi 0, %s145
      %s160 = sphi 0, %s146
      %s164 = sphi 0, %s164
      %s166 = sphi 0, %s164
      %s167 = sphi 0, %s166
      %s181 = sphi 0, %s167
      %s189 = sphi 0, %s191
      %s192 = sphi 0, %s189
      %s193 = sphi 0, %s192
      %s209 = sphi 0, %s193
    $region4: #{tpu_custom_call.1} parent=1 // loop_header_branch
      %18 = sbr.rel (%p16) target = $region8
    $region5: #{tpu_custom_call.1} parent=1 // loop_body
      %s20 = ssub.s32 %s15, 1
      %s21 = ssub.s32 %s15, 2
      %s28 = sadd.s32 1, %s23
      %p29 = scmp.ge.s32.totalorder %s28, 1
      %s30 = scalar_select %p29, 0, %s28
      %s31 = sadd.s32 1, %s22
      %s32 = scalar_select %p29, %s31, %s22
      %p33 = scmp.ge.s32.totalorder %s32, 2
      %s34 = scalar_select %p33, 0, %s32
      %s35 = ssub.s32 %s22, %s34
      %s36 = ssub.s32 %s23, %s30
      %s37 = sor.u32 %s35, %s36
      %p38 = scmp.eq.s32.totalorder %s37, 0
      %s40 = sadd.s32 %s39, 1
      %s41 = scalar_select %p38, %s39, %s40
      %p44 = pneg %p38
      %p45 = scmp.eq.s32.totalorder %s15, 1
      %p46 = por %p44, %p45
      %p47 = scmp.ne.s32.totalorder %s39, %s42
      %p48 = scmp.eq.s32.totalorder %s15, 0
      %p49 = por %p47, %p48
      %p50 = scmp.ne.s32.totalorder %s39, %s42
      %p51 = scmp.eq.s32.totalorder %s20, 1
      %p52 = por %p50, %p51
      %p53 = scmp.ne.s32.totalorder %s42, %s43
      %p54 = scmp.eq.s32.totalorder %s20, 0
      %p55 = por %p53, %p54
      %p56 = scmp.ne.s32.totalorder %s42, %s43
      %p57 = scmp.eq.s32.totalorder %s21, 1
      %p58 = por %p56, %p57
      %p60 = scmp.ne.s32.totalorder %s43, %s59
      %p61 = scmp.eq.s32.totalorder %s21, 0
      %p62 = por %p60, %p61
      %s63 = ssub.s32 %s22, %s34
      %s64 = ssub.s32 %s23, %s30
      %s65 = sor.u32 %s63, %s64
      %p66 = scmp.eq.s32.totalorder %s65, 0
      %s68 = sadd.s32 %s67, 1
      %s69 = scalar_select %p66, %s67, %s68
      %p72 = pneg %p66
      %p73 = scmp.eq.s32.totalorder %s15, 1
      %p74 = por %p72, %p73
      %p75 = scmp.ne.s32.totalorder %s67, %s70
      %p76 = scmp.eq.s32.totalorder %s15, 0
      %p77 = por %p75, %p76
      %p78 = scmp.ne.s32.totalorder %s67, %s70
      %p79 = scmp.eq.s32.totalorder %s20, 1
      %p80 = por %p78, %p79
      %p81 = scmp.ne.s32.totalorder %s70, %s71
      %p82 = scmp.eq.s32.totalorder %s20, 0
      %p83 = por %p81, %p82
      %p84 = scmp.ne.s32.totalorder %s70, %s71
      %p85 = scmp.eq.s32.totalorder %s21, 1
      %p86 = por %p84, %p85
      %p88 = scmp.ne.s32.totalorder %s71, %s87
      %p89 = scmp.eq.s32.totalorder %s21, 0
      %p90 = por %p88, %p89
      %s91 = ssub.s32 %s22, %s34
      %p92 = scmp.eq.s32.totalorder %s91, 0
      %s94 = sadd.s32 %s93, 1
      %s95 = scalar_select %p92, %s93, %s94
      %p98 = pneg %p92
      %p99 = scmp.eq.s32.totalorder %s15, 1
      %p100 = por %p98, %p99
      %p101 = scmp.ne.s32.totalorder %s93, %s96
      %p102 = scmp.eq.s32.totalorder %s15, 0
      %p103 = por %p101, %p102
      %p104 = scmp.ne.s32.totalorder %s93, %s96
      %p105 = scmp.eq.s32.totalorder %s20, 1
      %p106 = por %p104, %p105
      %p107 = scmp.ne.s32.totalorder %s96, %s97
      %p108 = scmp.eq.s32.totalorder %s20, 0
      %p109 = por %p107, %p108
      %p110 = scmp.ne.s32.totalorder %s96, %s97
      %p111 = scmp.eq.s32.totalorder %s21, 1
      %p112 = por %p110, %p111
      %p114 = scmp.ne.s32.totalorder %s97, %s113
      %p115 = scmp.eq.s32.totalorder %s21, 0
      %p116 = por %p114, %p115
      %s117 = ssub.s32 %s22, %s34
      %p118 = scmp.eq.s32.totalorder %s117, 0
      %s120 = sadd.s32 %s119, 1
      %s121 = scalar_select %p118, %s119, %s120
      %p124 = pneg %p118
      %p125 = scmp.eq.s32.totalorder %s15, 1
      %p126 = por %p124, %p125
      %p127 = scmp.ne.s32.totalorder %s119, %s122
      %p128 = scmp.eq.s32.totalorder %s15, 0
      %p129 = por %p127, %p128
      %p130 = scmp.ne.s32.totalorder %s119, %s122
      %p131 = scmp.eq.s32.totalorder %s20, 1
      %p132 = por %p130, %p131
      %p133 = scmp.ne.s32.totalorder %s122, %s123
      %p134 = scmp.eq.s32.totalorder %s20, 0
      %p135 = por %p133, %p134
      %p136 = scmp.ne.s32.totalorder %s122, %s123
      %p137 = scmp.eq.s32.totalorder %s21, 1
      %p138 = por %p136, %p137
      %p140 = scmp.ne.s32.totalorder %s123, %s139
      %p141 = scmp.eq.s32.totalorder %s21, 0
      %p142 = por %p140, %p141
      %s144 = sadd.s32 %s143, 1
      %p147 = scmp.eq.s32.totalorder %s15, 1
      %p148 = scmp.ne.s32.totalorder %s143, %s145
      %p149 = scmp.eq.s32.totalorder %s15, 0
      %p150 = por %p148, %p149
      %p151 = scmp.ne.s32.totalorder %s143, %s145
      %p152 = scmp.eq.s32.totalorder %s20, 1
      %p153 = por %p151, %p152
      %p154 = scmp.ne.s32.totalorder %s145, %s146
      %p155 = scmp.eq.s32.totalorder %s20, 0
      %p156 = por %p154, %p155
      %p157 = scmp.ne.s32.totalorder %s145, %s146
      %p158 = scmp.eq.s32.totalorder %s21, 1
      %p159 = por %p157, %p158
      %p161 = scmp.ne.s32.totalorder %s146, %s160
      %p162 = scmp.eq.s32.totalorder %s21, 0
      %p163 = por %p161, %p162
      %s165 = sadd.s32 %s164, 1
      %p168 = scmp.eq.s32.totalorder %s15, 1
      %p169 = scmp.ne.s32.totalorder %s164, %s166
      %p170 = scmp.eq.s32.totalorder %s15, 0
      %p171 = por %p169, %p170
      %p172 = scmp.ne.s32.totalorder %s164, %s166
      %p173 = scmp.eq.s32.totalorder %s20, 1
      %p174 = por %p172, %p173
      %p175 = scmp.ne.s32.totalorder %s166, %s167
      %p176 = scmp.eq.s32.totalorder %s20, 0
      %p177 = por %p175, %p176
      %p178 = scmp.ne.s32.totalorder %s166, %s167
      %p179 = scmp.eq.s32.totalorder %s21, 1
      %p180 = por %p178, %p179
      %p182 = scmp.ne.s32.totalorder %s167, %s181
      %p183 = scmp.eq.s32.totalorder %s21, 0
      %p184 = por %p182, %p183
      %s185 = ssub.s32 %s22, %s34
      %s186 = ssub.s32 %s23, %s30
      %s187 = sor.u32 %s185, %s186
      %p188 = scmp.eq.s32.totalorder %s187, 0
      %s190 = sadd.s32 %s189, 1
      %s191 = scalar_select %p188, %s189, %s190
      %p194 = pneg %p188
      %p195 = scmp.eq.s32.totalorder %s15, 1
      %p196 = por %p194, %p195
      %p197 = scmp.ne.s32.totalorder %s189, %s192
      %p198 = scmp.eq.s32.totalorder %s15, 0
      %p199 = por %p197, %p198
      %p200 = scmp.ne.s32.totalorder %s189, %s192
      %p201 = scmp.eq.s32.totalorder %s20, 1
      %p202 = por %p200, %p201
      %p203 = scmp.ne.s32.totalorder %s192, %s193
      %p204 = scmp.eq.s32.totalorder %s20, 0
      %p205 = por %p203, %p204
      %p206 = scmp.ne.s32.totalorder %s192, %s193
      %p207 = scmp.eq.s32.totalorder %s21, 1
      %p208 = por %p206, %p207
      %p210 = scmp.ne.s32.totalorder %s193, %s209
      %p211 = scmp.eq.s32.totalorder %s21, 0
      %p212 = por %p210, %p211
      %p213 = scmp.le.s32.totalorder 1, %s15
      %p214 = scmp.lt.s32.totalorder %s15, 3
      %p215 = pnand %p213, %p214
      %p216 = pneg %p215
      // Predicated region
      $region9: #{tpu_custom_call.1} parent=5 // pred_check
        _
      $region10: #{tpu_custom_call.1} parent=5 // pred_check_branch
        %218 = sbr.rel (%p215) target = $region12
      $region11: #{tpu_custom_call.1} parent=5 // pred_region
        %s219 = ssub.s32 %s15, 1
        // Predicated region
        $region13: #{tpu_custom_call.1} parent=11 // pred_check
          %p220 = pneg %p156
        $region14: #{tpu_custom_call.1} parent=11 // pred_check_branch
          %222 = sbr.rel (%p220) target = $region16
        $region15: #{tpu_custom_call.1} parent=11 // pred_region
          _
        $region16: #{tpu_custom_call.1} parent=11 // pred_fallthru
          _
        // Predicated region
        $region17: #{tpu_custom_call.1} parent=11 // pred_check
          %p223 = pneg %p177
        $region18: #{tpu_custom_call.1} parent=11 // pred_check_branch
          %225 = sbr.rel (%p223) target = $region20
        $region19: #{tpu_custom_call.1} parent=11 // pred_region
          _
        $region20: #{tpu_custom_call.1} parent=11 // pred_fallthru
          _
      $region12: #{tpu_custom_call.1} parent=5 // pred_fallthru
        _
      %p226 = scmp.lt.s32.totalorder %s15, 2
      // Predicated region
      $region21: #{tpu_custom_call.1} parent=5 // pred_check
        %p227 = pneg %p226
      $region22: #{tpu_custom_call.1} parent=5 // pred_check_branch
        %229 = sbr.rel (%p227) target = $region24
      $region23: #{tpu_custom_call.1} parent=5 // pred_region
        // Predicated region
        $region25: #{tpu_custom_call.1} parent=23 // pred_check
          %p230 = pneg %p49
        $region26: #{tpu_custom_call.1} parent=23 // pred_check_branch
          %232 = sbr.rel (%p230) target = $region28
        $region27: #{tpu_custom_call.1} parent=23 // pred_region
          %s233 = smul.u32 2, %s23
          %p234 = scmp.lt.s32.totalorder %s22, 1
          %s235 = scalar_select %p234, %s22, 1
          %p236 = scmp.lt.s32.totalorder %s233, 1
          %s237 = scalar_select %p236, %s233, 1
          %s238 = smul.addr %s235, 2
          %s239 = sadd.s32 %s237, %s238
          %s240 = smul.addr %s239, 8
          %s241 = scalar_lea.vmem %s0, %s240
          %s242 = smul.u32 2, %s23
        $region28: #{tpu_custom_call.1} parent=23 // pred_fallthru
          _
        // Predicated region
        $region29: #{tpu_custom_call.1} parent=23 // pred_check
          %p243 = pneg %p77
        $region30: #{tpu_custom_call.1} parent=23 // pred_check_branch
          %245 = sbr.rel (%p243) target = $region32
        $region31: #{tpu_custom_call.1} parent=23 // pred_region
          %s246 = smul.u32 2, %s23
          %p247 = scmp.lt.s32.totalorder %s22, 1
          %s248 = scalar_select %p247, %s22, 1
          %p249 = scmp.lt.s32.totalorder %s246, 1
          %s250 = scalar_select %p249, %s246, 1
          %s251 = smul.addr %s248, 2
          %s252 = sadd.s32 %s250, %s251
          %s253 = smul.addr %s252, 2
          %s254 = scalar_lea.vmem %s1, %s253
          %s255 = smul.u32 2, %s23
        $region32: #{tpu_custom_call.1} parent=23 // pred_fallthru
          _
        // Predicated region
        $region33: #{tpu_custom_call.1} parent=23 // pred_check
          %p256 = pneg %p103
        $region34: #{tpu_custom_call.1} parent=23 // pred_check_branch
          %258 = sbr.rel (%p256) target = $region36
        $region35: #{tpu_custom_call.1} parent=23 // pred_region
          %p259 = scmp.lt.s32.totalorder %s22, 1
          %s260 = scalar_select %p259, %s22, 1
          %s261 = smul.addr %s260, 8
          %s262 = smul.addr %s261, 4
          %s263 = scalar_lea.vmem %s2, %s262
        $region36: #{tpu_custom_call.1} parent=23 // pred_fallthru
          _
        // Predicated region
        $region37: #{tpu_custom_call.1} parent=23 // pred_check
          %p264 = pneg %p129
        $region38: #{tpu_custom_call.1} parent=23 // pred_check_branch
          %266 = sbr.rel (%p264) target = $region40
        $region39: #{tpu_custom_call.1} parent=23 // pred_region
          %p267 = scmp.lt.s32.totalorder %s22, 1
          %s268 = scalar_select %p267, %s22, 1
          %s269 = smul.addr %s268, 2
          %s270 = scalar_lea.vmem %s3, %s269
        $region40: #{tpu_custom_call.1} parent=23 // pred_fallthru
          _
      $region24: #{tpu_custom_call.1} parent=5 // pred_fallthru
        _
      %p271 = scmp.le.s32.totalorder 1, %s15
      %p272 = scmp.lt.s32.totalorder %s15, 3
      %p273 = pnand %p271, %p272
      %p274 = pneg %p273
      // Predicated region
      $region41: #{tpu_custom_call.1} parent=5 // pred_check
        _
      $region42: #{tpu_custom_call.1} parent=5 // pred_check_branch
        %276 = sbr.rel (%p273) target = $region44
      $region43: #{tpu_custom_call.1} parent=5 // pred_region
        %s277 = ssub.s32 %s15, 1
        %s278 = smul.u32 2, %s25
        %p279 = scmp.lt.s32.totalorder %s24, 1
        %s280 = scalar_select %p279, %s24, 1
        %p281 = scmp.lt.s32.totalorder %s278, 1
        %s282 = scalar_select %p281, %s278, 1
        %s283 = smul.addr %s280, 2
        %s284 = sadd.s32 %s282, %s283
        %s285 = smul.addr %s284, 8
        %s286 = scalar_lea.vmem %s0, %s285
        %p287 = pneg %p55
        %p288 = pneg %p52
        %s289 = smul.u32 2, %s25
        %p290 = scmp.lt.s32.totalorder %s24, 1
        %s291 = scalar_select %p290, %s24, 1
        %p292 = scmp.lt.s32.totalorder %s289, 1
        %s293 = scalar_select %p292, %s289, 1
        %s294 = smul.addr %s291, 2
        %s295 = sadd.s32 %s293, %s294
        %s296 = smul.addr %s295, 2
        %s297 = scalar_lea.vmem %s1, %s296
        %p298 = pneg %p83
        %p299 = pneg %p80
        %p300 = scmp.lt.s32.totalorder %s24, 1
        %s301 = scalar_select %p300, %s24, 1
        %s302 = smul.addr %s301, 8
        %s303 = smul.addr %s302, 4
        %s304 = scalar_lea.vmem %s2, %s303
        %p305 = pneg %p109
        %p306 = pneg %p106
        %p307 = scmp.lt.s32.totalorder %s24, 1
        %s308 = scalar_select %p307, %s24, 1
        %s309 = smul.addr %s308, 2
        %s310 = scalar_lea.vmem %s3, %s309
        %p311 = pneg %p135
        %p312 = pneg %p132
        %p313 = pneg %p156
        %p314 = pneg %p153
        %p315 = pneg %p177
        %p316 = pneg %p174
        %p317 = pneg %p205
        %p318 = pneg %p202
        %s319 = sand.u32 %s192, 1
        %s320 = scalar_lea.sflag [#allocation3], %s319
        %s321 = sand.u32 %s192, 1
        %s322 = smul.addr %s321, 16
        %s323 = scalar_lea.vmem [#allocation2], %s322
        %s324 = smul.u32 2, %s25
        %p325 = scmp.lt.s32.totalorder %s24, 1
        %s326 = scalar_select %p325, %s24, 1
        %p327 = scmp.lt.s32.totalorder %s324, 1
        %s328 = scalar_select %p327, %s324, 1
        %s329 = smul.addr %s326, 2
        %s330 = sadd.s32 %s328, %s329
        %s331 = smul.addr %s330, 8
        %s332 = scalar_lea.vmem %s0, %s331
        %s333 = smul.u32 2, %s25
        %s334 = smul.u32 2, %s25
        %p335 = scmp.lt.s32.totalorder %s24, 1
        %s336 = scalar_select %p335, %s24, 1
        %p337 = scmp.lt.s32.totalorder %s334, 1
        %s338 = scalar_select %p337, %s334, 1
        %s339 = smul.addr %s336, 2
        %s340 = sadd.s32 %s338, %s339
        %s341 = smul.addr %s340, 2
        %s342 = scalar_lea.vmem %s1, %s341
        %s343 = smul.u32 2, %s25
        %p344 = scmp.lt.s32.totalorder %s24, 1
        %s345 = scalar_select %p344, %s24, 1
        %s346 = smul.addr %s345, 8
        %s347 = smul.addr %s346, 4
        %s348 = scalar_lea.vmem %s2, %s347
        %p349 = scmp.lt.s32.totalorder %s24, 1
        %s350 = scalar_select %p349, %s24, 1
        %s351 = smul.addr %s350, 2
        %s352 = scalar_lea.vmem %s3, %s351
        %s353 = smul.u32 2, %s25
        %v355 = vld [vmem:[%s348] sm:$0xf]
        %v356 = vld [vmem:[%s348 + $0x4] sm:$0xf]
        %v357 = vld [vmem:[%s348 + $0x8] sm:$0xf]
        %v358 = vld [vmem:[%s348 + $0xc] sm:$0xf]
        %v359 = vld [vmem:[%s348 + $0x10] sm:$0xf]
        %v360 = vld [vmem:[%s348 + $0x14] sm:$0xf]
        %v361 = vld [vmem:[%s348 + $0x18] sm:$0xf]
        %v362 = vld [vmem:[%s348 + $0x1c] sm:$0xf]
        %v363 = vld [vmem:[%s342] sm:$0xf]
        %v372 = vunpack.c.l.b16 %v355
        %v373 = vunpack.c.l.b16 %v356
        %v374 = vunpack.c.l.b16 %v357
        %v375 = vunpack.c.l.b16 %v358
        %v376 = vunpack.c.l.b16 %v359
        %v377 = vunpack.c.l.b16 %v360
        %v378 = vunpack.c.l.b16 %v361
        %v379 = vunpack.c.l.b16 %v362
        %v380 = vpack.c.b16 %v373, %v372
        %v381 = vpack.c.b16 %v375, %v374
        %v382 = vpack.c.b16 %v377, %v376
        %v383 = vpack.c.b16 %v379, %v378
        %v386 = vunpack.c.l.s4 1983009808
        %v387 = vunpack.c.0.s8 %v386
        %v388 = vlaneseq
        %v389 = vshrl.u32 %v388, 7
        %v390 = vsub.s32 %v387, %v389
        %v391 = vrot.slane %v363, %v390
        %v392 = vcombine.high %v391, %v391
        %vm393 = vcmask 31744
        %v395 = vsel %vm393, %v380, 0
        %v398 = vsel %vm393, %v381, 0
        %v401 = vsel %vm393, %v382, 0
        %v404 = vsel %vm393, %v383, 0
        %vm406 = vcmask 1041408
        %v408 = vsel %vm406, %v391, 0
        %v411 = vsel %vm406, %v392, 0
        %413 = vmatprep.subr.bf16.mxu0 0
        %414 = vmatpush1.bf16.msra.mxu0 0
        %415 = vmatprep.subr.bf16.mxu0 0
        %416 = vmatpush1.bf16.msra.mxu0 0
        %417 = vmatprep.subr.bf16.mxu0 0
        %418 = vmatpush1.bf16.msra.mxu0 0
        %419 = vmatprep.subr.bf16.mxu0 0
        %420 = vmatpush1.bf16.msra.mxu0 0
        %421 = vmatprep.subr.bf16.mxu0 0
        %422 = vmatpush1.bf16.msra.mxu0 0
        %423 = vmatprep.subr.bf16.mxu0 0
        %424 = vmatpush1.bf16.msra.mxu0 0
        %425 = vmatprep.subr.bf16.mxu0 0
        %426 = vmatpush1.bf16.msra.mxu0 0
        %427 = vmatprep.subr.bf16.mxu0 %v411
        %428 = vmatpush1.bf16.msra.mxu0 %v408
        %429 = vmatprep.subr.bf16.mxu0 0
        %430 = vmatpush2.bf16.msra.mxu0 0
        %431 = vmatprep.subr.bf16.mxu0 0
        %432 = vmatpush2.bf16.msra.mxu0 0
        %433 = vmatprep.subr.bf16.mxu0 0
        %434 = vmatpush2.bf16.msra.mxu0 0
        %435 = vmatprep.subr.bf16.mxu0 0
        %436 = vmatpush2.bf16.msra.mxu0 0
        %437 = vmatprep.subr.bf16.mxu0 0
        %438 = vmatpush2.bf16.msra.mxu0 0
        %439 = vmatprep.subr.bf16.mxu0 0
        %440 = vmatpush2.bf16.msra.mxu0 0
        %441 = vmatprep.subr.bf16.mxu0 0
        %442 = vmatpush2.bf16.msra.mxu0 0
        %443 = vmatprep.subr.bf16.mxu0 0
        %444 = vmatpush2.bf16.msra.mxu0 0
        %445 = vmatprep.mubr.bf16.mxu0 0
        %446 = vmatmul.mubr.bf16.gmra.mxu0 %v395
        %v447 = vpop.f32.mrf.mxu0
        %v448 = vadd.f32 0.0, %v447
        %v449 = vpop.f32.mrf.mxu0
        %v450 = vadd.f32 0.0, %v449
        %v451 = vpop.f32.mrf.mxu0
        %v452 = vadd.f32 0.0, %v451
        %v453 = vpop.f32.mrf.mxu0
        %v454 = vadd.f32 0.0, %v453
        %455 = vmatprep.mubr.bf16.mxu0 0
        %456 = vmatmul.mubr.bf16.gmra.mxu0 %v398
        %v457 = vpop.f32.mrf.mxu0
        %v458 = vadd.f32 0.0, %v457
        %v459 = vpop.f32.mrf.mxu0
        %v460 = vadd.f32 0.0, %v459
        %v461 = vpop.f32.mrf.mxu0
        %v462 = vadd.f32 0.0, %v461
        %v463 = vpop.f32.mrf.mxu0
        %v464 = vadd.f32 0.0, %v463
        %465 = vmatprep.mubr.bf16.mxu0 0
        %466 = vmatmul.mubr.bf16.gmra.mxu0 %v401
        %v467 = vpop.f32.mrf.mxu0
        %v468 = vadd.f32 0.0, %v467
        %v469 = vpop.f32.mrf.mxu0
        %v470 = vadd.f32 0.0, %v469
        %v471 = vpop.f32.mrf.mxu0
        %v472 = vadd.f32 0.0, %v471
        %v473 = vpop.f32.mrf.mxu0
        %v474 = vadd.f32 0.0, %v473
        %475 = vmatprep.mubr.bf16.mxu0 0
        %476 = vmatmul.mubr.bf16.gmra.mxu0 %v404
        %v477 = vpop.f32.mrf.mxu0
        %v478 = vadd.f32 0.0, %v477
        %v479 = vpop.f32.mrf.mxu0
        %v480 = vadd.f32 0.0, %v479
        %v481 = vpop.f32.mrf.mxu0
        %v482 = vadd.f32 0.0, %v481
        %v483 = vpop.f32.mrf.mxu0
        %v484 = vadd.f32 0.0, %v483
        %485 = vdwg.mxu0
        %v486 = vld [vmem:[%s352] sm:$0x3]
        %v487 = vpack.c.bf16 %v452, %v448
        %v488 = vpack.c.bf16 %v454, %v450
        %v489 = vpack.c.bf16 %v462, %v458
        %v490 = vpack.c.bf16 %v464, %v460
        %v491 = vpack.c.bf16 %v472, %v468
        %v492 = vpack.c.bf16 %v474, %v470
        %v493 = vpack.c.bf16 %v482, %v478
        %v494 = vpack.c.bf16 %v484, %v480
        %vm495 = vcmask 523264
        %v497 = vsel %vm495, %v486, 0
        %499 = vmatprep.subr.bf16.mxu0 0
        %500 = vmatpush1.bf16.msra.mxu0 0
        %501 = vmatprep.subr.bf16.mxu0 0
        %502 = vmatpush1.bf16.msra.mxu0 0
        %503 = vmatprep.subr.bf16.mxu0 0
        %504 = vmatpush1.bf16.msra.mxu0 0
        %505 = vmatprep.subr.bf16.mxu0 0
        %506 = vmatpush1.bf16.msra.mxu0 0
        %507 = vmatprep.subr.bf16.mxu0 %v494
        %508 = vmatpush1.bf16.msra.mxu0 %v493
        %509 = vmatprep.subr.bf16.mxu0 %v492
        %510 = vmatpush1.bf16.msra.mxu0 %v491
        %511 = vmatprep.subr.bf16.mxu0 %v490
        %512 = vmatpush1.bf16.msra.mxu0 %v489
        %513 = vmatprep.subr.bf16.mxu0 %v488
        %514 = vmatpush1.bf16.msra.mxu0 %v487
        %515 = vmatprep.subr.bf16.mxu0 0
        %516 = vmatpush2.bf16.msra.mxu0 0
        %517 = vmatprep.subr.bf16.mxu0 0
        %518 = vmatpush2.bf16.msra.mxu0 0
        %519 = vmatprep.subr.bf16.mxu0 0
        %520 = vmatpush2.bf16.msra.mxu0 0
        %521 = vmatprep.subr.bf16.mxu0 0
        %522 = vmatpush2.bf16.msra.mxu0 0
        %523 = vmatprep.subr.bf16.mxu0 0
        %524 = vmatpush2.bf16.msra.mxu0 0
        %525 = vmatprep.subr.bf16.mxu0 0
        %526 = vmatpush2.bf16.msra.mxu0 0
        %527 = vmatprep.subr.bf16.mxu0 0
        %528 = vmatpush2.bf16.msra.mxu0 0
        %529 = vmatprep.subr.bf16.mxu0 0
        %530 = vmatpush2.bf16.msra.mxu0 0
        %531 = vmatprep.mubr.bf16.mxu0 0
        %532 = vmatmul.mubr.bf16.gmra.mxu0 %v497
        %v533 = vpop.f32.mrf.mxu0
        %v534 = vadd.f32 0.0, %v533
        %v535 = vpop.f32.mrf.mxu0
        %v536 = vadd.f32 0.0, %v535
        %v537 = vpop.f32.mrf.mxu0
        %v538 = vpop.f32.mrf.mxu0
        %539 = vdwg.mxu0
        %v540 = vld [vmem:[%s4] sm:$0xff]
        %v541 = vld [vmem:[%s5] sm:$0xff]
        %543 = vset.pattern.permute.xlu0 0
        %544 = vperm.xlu0 %543, %v541
        %v545 = vpop.permute.xlu0 %544
        %v548 = vsel %vm393, %v540, 0
        %vm550 = vcmask 1043456
        %v552 = vsel %vm550, %v534, 0
        %v555 = vsel %vm550, %v536, 0
        %557 = vmatprep.subr.mxu0 0.0
        %558 = vmatpush1.msra.mxu0 0.0
        %559 = vmatprep.subr.mxu0 0.0
        %560 = vmatpush1.msra.mxu0 0.0
        %561 = vmatprep.subr.mxu0 0.0
        %562 = vmatpush1.msra.mxu0 0.0
        %563 = vmatprep.subr.mxu0 0.0
        %564 = vmatpush1.msra.mxu0 0.0
        %565 = vmatprep.subr.mxu0 0.0
        %566 = vmatpush1.msra.mxu0 0.0
        %567 = vmatprep.subr.mxu0 0.0
        %568 = vmatpush1.msra.mxu0 0.0
        %569 = vmatprep.subr.mxu0 0.0
        %570 = vmatpush1.msra.mxu0 0.0
        %571 = vmatprep.subr.mxu0 0.0
        %572 = vmatpush1.msra.mxu0 0.0
        %573 = vmatprep.subr.mxu0 0.0
        %574 = vmatpush1.msra.mxu0 0.0
        %575 = vmatprep.subr.mxu0 0.0
        %576 = vmatpush1.msra.mxu0 0.0
        %577 = vmatprep.subr.mxu0 0.0
        %578 = vmatpush1.msra.mxu0 0.0
        %579 = vmatprep.subr.mxu0 0.0
        %580 = vmatpush1.msra.mxu0 0.0
        %581 = vmatprep.subr.mxu0 0.0
        %582 = vmatpush1.msra.mxu0 0.0
        %583 = vmatprep.subr.mxu0 0.0
        %584 = vmatpush1.msra.mxu0 0.0
        %585 = vmatprep.subr.mxu0 0.0
        %586 = vmatpush1.msra.mxu0 0.0
        %587 = vmatprep.subr.mxu0 %v555
        %588 = vmatpush1.msra.mxu0 %v552
        %589 = vmatprep.subr.mxu0 0.0
        %590 = vmatpush2.msra.mxu0 0.0
        %591 = vmatprep.subr.mxu0 0.0
        %592 = vmatpush2.msra.mxu0 0.0
        %593 = vmatprep.subr.mxu0 0.0
        %594 = vmatpush2.msra.mxu0 0.0
        %595 = vmatprep.subr.mxu0 0.0
        %596 = vmatpush2.msra.mxu0 0.0
        %597 = vmatprep.subr.mxu0 0.0
        %598 = vmatpush2.msra.mxu0 0.0
        %599 = vmatprep.subr.mxu0 0.0
        %600 = vmatpush2.msra.mxu0 0.0
        %601 = vmatprep.subr.mxu0 0.0
        %602 = vmatpush2.msra.mxu0 0.0
        %603 = vmatprep.subr.mxu0 0.0
        %604 = vmatpush2.msra.mxu0 0.0
        %605 = vmatprep.subr.mxu0 0.0
        %606 = vmatpush2.msra.mxu0 0.0
        %607 = vmatprep.subr.mxu0 0.0
        %608 = vmatpush2.msra.mxu0 0.0
        %609 = vmatprep.subr.mxu0 0.0
        %610 = vmatpush2.msra.mxu0 0.0
        %611 = vmatprep.subr.mxu0 0.0
        %612 = vmatpush2.msra.mxu0 0.0
        %613 = vmatprep.subr.mxu0 0.0
        %614 = vmatpush2.msra.mxu0 0.0
        %615 = vmatprep.subr.mxu0 0.0
        %616 = vmatpush2.msra.mxu0 0.0
        %617 = vmatprep.subr.mxu0 0.0
        %618 = vmatpush2.msra.mxu0 0.0
        %619 = vmatprep.subr.mxu0 0.0
        %620 = vmatpush2.msra.mxu0 0.0
        %621 = vmatprep.mubr.f32.mxu0 0.0
        %622 = vmatmul.mubr.f32.gmra.mxu0 %v548
        %v623 = vpop.f32.mrf.mxu0
        %v624 = vadd.f32 %v545, %v623
        %v625 = vpop.f32.mrf.mxu0
        %v626 = vadd.f32 %v545, %v625
        %627 = vdwg.mxu0
        %v628 = vld [vmem:[%s332] sm:$0xff]
        %v629 = vld [vmem:[%s332 + $0x8] sm:$0xff]
        %v630 = vadd.f32 %v624, %v628
        %v631 = vadd.f32 %v626, %v629
        %632 = vst [vmem:[%s323] sm:$0xff] %v630
        %633 = vst [vmem:[%s323 + $0x8] sm:$0xff] %v631
        %s634 = sand.u32 %s192, 1
        %s635 = scalar_lea.sflag [#allocation3], %s634
        %s636 = sand.u32 %s192, 1
        %s637 = smul.addr %s636, 16
        %s638 = scalar_lea.vmem [#allocation2], %s637
        // Predicated region
        $region45: #{tpu_custom_call.1} parent=43 // pred_check
          %p639 = pneg %p202
        $region46: #{tpu_custom_call.1} parent=43 // pred_check_branch
          %641 = sbr.rel (%p639) target = $region48
        $region47: #{tpu_custom_call.1} parent=43 // pred_region
          %s642 = smul.u32 2, %s25
          %s644 = ssub.s32 256, 256
          %645 = vsyncadd %s635, %s644
          %s646 = smul.addr %s24, 2
          %s647 = sadd.s32 %s642, %s646
          %s648 = smul.addr %s647, 128
          %s649 = scalar_lea.hbm %s6, %s648
          %s651 = sshll.u32 %s638, 4
          %s652 = int_to_ptr.vmem [resolvable:$true] %s651
          %654 = dma.vmem_to_hbm [thread:$0]  %s652, 256, %s649, %s635
        $region48: #{tpu_custom_call.1} parent=43 // pred_fallthru
          _
      $region44: #{tpu_custom_call.1} parent=5 // pred_fallthru
        _
      %p655 = scmp.le.s32.totalorder 2, %s15
      // Predicated region
      $region49: #{tpu_custom_call.1} parent=5 // pred_check
        %p656 = pneg %p655
      $region50: #{tpu_custom_call.1} parent=5 // pred_check_branch
        %658 = sbr.rel (%p656) target = $region52
      $region51: #{tpu_custom_call.1} parent=5 // pred_region
        %s659 = ssub.s32 %s15, 2
        // Predicated region
        $region53: #{tpu_custom_call.1} parent=51 // pred_check
          %p660 = pneg %p208
        $region54: #{tpu_custom_call.1} parent=51 // pred_check_branch
          %662 = sbr.rel (%p660) target = $region56
        $region55: #{tpu_custom_call.1} parent=51 // pred_region
          %s663 = sand.u32 %s193, 1
          %s664 = scalar_lea.sflag [#allocation3], %s663
          %s665 = sand.u32 %s193, 1
          %s666 = smul.addr %s665, 16
          %s667 = scalar_lea.vmem [#allocation2], %s666
          %668 = dma.done %s664, 256
        $region56: #{tpu_custom_call.1} parent=51 // pred_fallthru
          _
      $region52: #{tpu_custom_call.1} parent=5 // pred_fallthru
        _
    $region6: #{tpu_custom_call.1} parent=1 // loop_footer
      %s19 = sadd.s32 1, %s15
    $region7: #{tpu_custom_call.1} parent=1 // loop_footer_branch
      %14 = sbr.rel target = $region3
    $region8: #{tpu_custom_call.1} parent=1 // loop_exit
      _
    %669 = vsyncpa [#allocation3], 1
    %s670 = scalar_lea.sflag [#allocation3], 1
    %671 = vsyncpa %s670, 1

</llo_original>
